<compile_context>
chip_gen: v7x
topology: tpu7x:2x2x1
jax: 0.10.0
libtpu: 0.0.40
codegen_flags: <defaults>
</compile_context>

<pallas_src>
import functools

import jax
import jax.numpy as jnp
from jax.experimental import pallas as pl
from jax.experimental.pallas import tpu as pltpu

NEG_SLOPE = 0.1            # LeakyReLU(0.1)
PATCH = 4                  # Conv2d(3,128,4,stride=4)
POOL = 8                   # AvgPool2d(8)
PATCHES_PER_BLOCK = POOL * POOL          # 64 patch-rows per pool block
MAX_BLOCKS_PER_TILE = 32                 # -> TILE_N <= 2048 rows (safe on v7x 64MiB VMEM too)


def _lrelu(x):
    # max(x, 0.1*x): 2 VALU ops instead of cmp+select+mul.
    return jnp.maximum(x, NEG_SLOPE * x)


def classifier_kernel(patches_ref,
                      w0_ref, b0_ref, w1_ref, b1_ref, w2_ref, b2_ref,
                      w3_ref, b3_ref, w4_ref, b4_ref, wl_ref, bl_ref,
                      out_ref, *, blocks_per_tile):
    x = patches_ref[...]                                           # (TILE_N, 48) bf16

    # Conv2d(3,128,4,4) as patch matmul + LeakyReLU (f32 accum, bf16 re-cast).
    h = _lrelu(jnp.dot(x, w0_ref[...],
                       preferred_element_type=jnp.float32) + b0_ref[...])
    # Three Conv2d(128,128,1) + LeakyReLU.
    h = _lrelu(jnp.dot(h.astype(jnp.bfloat16), w1_ref[...],
                       preferred_element_type=jnp.float32) + b1_ref[...])
    h = _lrelu(jnp.dot(h.astype(jnp.bfloat16), w2_ref[...],
                       preferred_element_type=jnp.float32) + b2_ref[...])
    h = _lrelu(jnp.dot(h.astype(jnp.bfloat16), w3_ref[...],
                       preferred_element_type=jnp.float32) + b3_ref[...])
    # Conv2d(128,32,1) (no activation).
    feat = (jnp.dot(h.astype(jnp.bfloat16), w4_ref[...],
                    preferred_element_type=jnp.float32) + b4_ref[...])   # (TILE_N, 32) f32

    # AvgPool2d(8): rows are ordered so each pool block owns 64 consecutive rows.
    pooled = feat.reshape(blocks_per_tile, PATCHES_PER_BLOCK, 32).sum(axis=1)
    pooled = pooled * (1.0 / PATCHES_PER_BLOCK)                     # (blocks, 32) f32

    # Linear(32, 3), padded to 128 output lanes -> dense (unmasked) store.
    out_ref[...] = (jnp.dot(pooled.astype(jnp.bfloat16), wl_ref[...],
                            preferred_element_type=jnp.float32) + bl_ref[...])


def init_params(key):
    """Deterministic synthetic parameters (shapes match the torch module)."""
    ks = jax.random.split(key, 12)
    p = {}
    # Conv2d(3,128,4,4): torch weight (128,3,4,4) -> (c,kh,kw)-flattened (48,128).
    p["w0"] = jax.random.normal(ks[0], (48, 128), jnp.float32) * 0.05
    p["b0"] = jax.random.normal(ks[1], (1, 128), jnp.float32) * 0.01
    p["w1"] = jax.random.normal(ks[2], (128, 128), jnp.float32) * 0.05
    p["b1"] = jax.random.normal(ks[3], (1, 128), jnp.float32) * 0.01
    p["w2"] = jax.random.normal(ks[4], (128, 128), jnp.float32) * 0.05
    p["b2"] = jax.random.normal(ks[5], (1, 128), jnp.float32) * 0.01
    p["w3"] = jax.random.normal(ks[6], (128, 128), jnp.float32) * 0.05
    p["b3"] = jax.random.normal(ks[7], (1, 128), jnp.float32) * 0.01
    p["w4"] = jax.random.normal(ks[8], (128, 32), jnp.float32) * 0.05
    p["b4"] = jax.random.normal(ks[9], (1, 32), jnp.float32) * 0.01
    p["wl"] = jax.random.normal(ks[10], (32, 3), jnp.float32) * 0.1
    p["bl"] = jax.random.normal(ks[11], (1, 3), jnp.float32) * 0.01
    return p


def _choose_blocks_per_tile(total_blocks, max_blocks):
    if total_blocks <= max_blocks:
        return total_blocks                      # single tile; block == full array
    for d in range(max_blocks, 0, -1):           # prefer multiples of 8 for (8,128) tiling
        if d % 8 == 0 and total_blocks % d == 0:
            return d
    return total_blocks                          # fallback: one big tile


def classifier_forward(x_nchw, params, *, max_blocks_per_tile=MAX_BLOCKS_PER_TILE):
    B, C, H, W = x_nchw.shape
    assert C == 3 and H % (PATCH * POOL) == 0 and W % (PATCH * POOL) == 0
    Hp, Wp = H // PATCH, W // PATCH              # conv-output grid
    Ho, Wo = Hp // POOL, Wp // POOL              # avgpool-output grid
    total_blocks = B * Ho * Wo                   # rows of the final (M, 3) output
    # Note: for ClassSR the inputs are 32x32 sub-images (Ho = Wo = 1), where this
    # row layout matches torch's .view(-1, 32) exactly.

    # --- patchify (glue, in bf16, single pass) -----------------------------
    # Row order (b, oh, ow, bh, bw): the 64 patches of each 8x8 pool block are
    # contiguous.  Each row flattens its 4x4x3 patch in (c, kh, kw) order, i.e.
    # it matches torch_weight(128,3,4,4).reshape(128,48).T for the first conv.
    xb = x_nchw.astype(jnp.bfloat16)
    patches = (xb.reshape(B, 3, Ho, POOL, PATCH, Wo, POOL, PATCH)
                 .transpose(0, 2, 5, 3, 6, 1, 4, 7)
                 .reshape(total_blocks * PATCHES_PER_BLOCK, 48))

    # --- parameters: bf16 weights, f32 biases, lane-padded head ------------
    def bf(a):
        return a.astype(jnp.bfloat16)

    w0, w1, w2, w3, w4 = (bf(params[k]) for k in ("w0", "w1", "w2", "w3", "w4"))
    b0, b1, b2, b3, b4 = (params[k].astype(jnp.float32)
                          for k in ("b0", "b1", "b2", "b3", "b4"))
    wl_pad = jnp.zeros((32, 128), jnp.bfloat16).at[:, :3].set(bf(params["wl"]))
    bl_pad = jnp.zeros((1, 128), jnp.float32).at[:, :3].set(
        params["bl"].astype(jnp.float32))
    flat_params = (w0, b0, w1, b1, w2, b2, w3, b3, w4, b4, wl_pad, bl_pad)

    # --- tiling -------------------------------------------------------------
    blocks_per_tile = _choose_blocks_per_tile(total_blocks, max_blocks_per_tile)
    tile_rows = blocks_per_tile * PATCHES_PER_BLOCK
    grid = (total_blocks // blocks_per_tile,)

    patch_spec = pl.BlockSpec((tile_rows, 48), lambda i: (i, 0))
    param_specs = [pl.BlockSpec(p.shape, lambda i: (0, 0)) for p in flat_params]
    out_spec = pl.BlockSpec((blocks_per_tile, 128), lambda i: (i, 0))

    out_padded = pl.pallas_call(
        functools.partial(classifier_kernel, blocks_per_tile=blocks_per_tile),
        out_shape=jax.ShapeDtypeStruct((total_blocks, 128), jnp.float32),
        grid=grid,
        in_specs=[patch_spec] + param_specs,
        out_specs=out_spec,
        compiler_params=pltpu.CompilerParams(
            dimension_semantics=("parallel",)),
    )(patches, *flat_params)

    return out_padded[:, :3], patches


def reference_forward(patches_bf16, params, total_blocks):
    """Pure-JAX reference with the same bf16/f32 mixed precision."""
    def mm(a, w):
        return jnp.dot(a.astype(jnp.bfloat16), w.astype(jnp.bfloat16),
                       preferred_element_type=jnp.float32)

    h = _lrelu(mm(patches_bf16, params["w0"]) + params["b0"])
    h = _lrelu(mm(h, params["w1"]) + params["b1"])
    h = _lrelu(mm(h, params["w2"]) + params["b2"])
    h = _lrelu(mm(h, params["w3"]) + params["b3"])
    feat = mm(h, params["w4"]) + params["b4"]
    pooled = feat.reshape(total_blocks, PATCHES_PER_BLOCK, 32).mean(axis=1)
    return mm(pooled, params["wl"]) + params["bl"]


if __name__ == "__main__":
    key = jax.random.PRNGKey(0)
    k_x, k_p = jax.random.split(key)

    # ClassSR feeds 32x32 sub-images: (B, 3, 32, 32) -> output (B, 3)
    B, H, W = 2, 32, 32
    x = jax.random.normal(k_x, (B, 3, H, W), jnp.float32)
    params = init_params(k_p)

    out, patches = classifier_forward(x, params)
    out = jax.block_until_ready(out)

    total_blocks = B * (H // (PATCH * POOL)) * (W // (PATCH * POOL))
    ref = reference_forward(patches, params, total_blocks)
    assert out.shape == (total_blocks, 3), out.shape
    assert jnp.allclose(out, ref, atol=1e-2, rtol=1e-2), (out, ref)

    print("KERNEL_OK")
</pallas_src>

<mosaic_0001>
module attributes {stable_mosaic.version = 11 : i64} {
  func.func @classifier_kernel(%arg0: i32, %arg1: memref<128x48xbf16, #tpu.memory_space<vmem>>, %arg2: memref<48x128xbf16, #tpu.memory_space<vmem>>, %arg3: memref<1x128xf32, #tpu.memory_space<vmem>>, %arg4: memref<128x128xbf16, #tpu.memory_space<vmem>>, %arg5: memref<1x128xf32, #tpu.memory_space<vmem>>, %arg6: memref<128x128xbf16, #tpu.memory_space<vmem>>, %arg7: memref<1x128xf32, #tpu.memory_space<vmem>>, %arg8: memref<128x128xbf16, #tpu.memory_space<vmem>>, %arg9: memref<1x128xf32, #tpu.memory_space<vmem>>, %arg10: memref<128x32xbf16, #tpu.memory_space<vmem>>, %arg11: memref<1x32xf32, #tpu.memory_space<vmem>>, %arg12: memref<32x128xbf16, #tpu.memory_space<vmem>>, %arg13: memref<1x128xf32, #tpu.memory_space<vmem>>, %arg14: memref<2x128xf32, #tpu.memory_space<vmem>>) attributes {dimension_semantics = [#tpu.dimension_semantics<parallel>], iteration_bounds = array<i64: 1>, scalar_prefetch = 0 : i64, scratch_operands = 0 : i64, tpu.core_type = #tpu.core_type<tc>, window_params = [{transform_indices = @transform_0, window_bounds = array<i64: 128, 48>}, {pipeline_mode = #tpu.pipeline_mode<synchronous>, transform_indices = @transform_1, window_bounds = array<i64: 48, 128>}, {pipeline_mode = #tpu.pipeline_mode<synchronous>, transform_indices = @transform_2, window_bounds = array<i64: 1, 128>}, {pipeline_mode = #tpu.pipeline_mode<synchronous>, transform_indices = @transform_3, window_bounds = array<i64: 128, 128>}, {pipeline_mode = #tpu.pipeline_mode<synchronous>, transform_indices = @transform_4, window_bounds = array<i64: 1, 128>}, {pipeline_mode = #tpu.pipeline_mode<synchronous>, transform_indices = @transform_5, window_bounds = array<i64: 128, 128>}, {pipeline_mode = #tpu.pipeline_mode<synchronous>, transform_indices = @transform_6, window_bounds = array<i64: 1, 128>}, {pipeline_mode = #tpu.pipeline_mode<synchronous>, transform_indices = @transform_7, window_bounds = array<i64: 128, 128>}, {pipeline_mode = #tpu.pipeline_mode<synchronous>, transform_indices = @transform_8, window_bounds = array<i64: 1, 128>}, {pipeline_mode = #tpu.pipeline_mode<synchronous>, transform_indices = @transform_9, window_bounds = array<i64: 128, 32>}, {pipeline_mode = #tpu.pipeline_mode<synchronous>, transform_indices = @transform_10, window_bounds = array<i64: 1, 32>}, {pipeline_mode = #tpu.pipeline_mode<synchronous>, transform_indices = @transform_11, window_bounds = array<i64: 32, 128>}, {pipeline_mode = #tpu.pipeline_mode<synchronous>, transform_indices = @transform_12, window_bounds = array<i64: 1, 128>}, {transform_indices = @transform_13, window_bounds = array<i64: 2, 128>}]} {
    %c0 = arith.constant 0 : index
    %c0_0 = arith.constant 0 : index
    %0 = vector.load %arg1[%c0, %c0_0] : memref<128x48xbf16, #tpu.memory_space<vmem>>, vector<128x48xbf16>
    %c0_1 = arith.constant 0 : index
    %c0_2 = arith.constant 0 : index
    %1 = vector.load %arg2[%c0_1, %c0_2] : memref<48x128xbf16, #tpu.memory_space<vmem>>, vector<48x128xbf16>
    %cst = arith.constant dense<0.000000e+00> : vector<128x128xf32>
    %2 = tpu.matmul %0, %1, %cst {dimension_numbers = #tpu.dot_dimension_numbers<[1], [0], [0], [1], [0, 0, 1, 1], [], []>} : vector<128x48xbf16>, vector<48x128xbf16>, vector<128x128xf32> -> vector<128x128xf32>
    %c0_3 = arith.constant 0 : index
    %c0_4 = arith.constant 0 : index
    %3 = vector.load %arg3[%c0_3, %c0_4] : memref<1x128xf32, #tpu.memory_space<vmem>>, vector<1x128xf32>
    %4 = vector.broadcast %3 : vector<1x128xf32> to vector<128x128xf32>
    %5 = arith.addf %2, %4 : vector<128x128xf32>
    %cst_5 = arith.constant 1.000000e-01 : f32
    %6 = vector.broadcast %cst_5 : f32 to vector<128x128xf32>
    %7 = arith.mulf %6, %5 : vector<128x128xf32>
    %8 = arith.maximumf %5, %7 : vector<128x128xf32>
    %9 = arith.truncf %8 : vector<128x128xf32> to vector<128x128xbf16>
    %c0_6 = arith.constant 0 : index
    %c0_7 = arith.constant 0 : index
    %10 = vector.load %arg4[%c0_6, %c0_7] : memref<128x128xbf16, #tpu.memory_space<vmem>>, vector<128x128xbf16>
    %cst_8 = arith.constant dense<0.000000e+00> : vector<128x128xf32>
    %11 = tpu.matmul %9, %10, %cst_8 {dimension_numbers = #tpu.dot_dimension_numbers<[1], [0], [0], [1], [0, 0, 1, 1], [], []>} : vector<128x128xbf16>, vector<128x128xbf16>, vector<128x128xf32> -> vector<128x128xf32>
    %c0_9 = arith.constant 0 : index
    %c0_10 = arith.constant 0 : index
    %12 = vector.load %arg5[%c0_9, %c0_10] : memref<1x128xf32, #tpu.memory_space<vmem>>, vector<1x128xf32>
    %13 = vector.broadcast %12 : vector<1x128xf32> to vector<128x128xf32>
    %14 = arith.addf %11, %13 : vector<128x128xf32>
    %cst_11 = arith.constant 1.000000e-01 : f32
    %15 = vector.broadcast %cst_11 : f32 to vector<128x128xf32>
    %16 = arith.mulf %15, %14 : vector<128x128xf32>
    %17 = arith.maximumf %14, %16 : vector<128x128xf32>
    %18 = arith.truncf %17 : vector<128x128xf32> to vector<128x128xbf16>
    %c0_12 = arith.constant 0 : index
    %c0_13 = arith.constant 0 : index
    %19 = vector.load %arg6[%c0_12, %c0_13] : memref<128x128xbf16, #tpu.memory_space<vmem>>, vector<128x128xbf16>
    %cst_14 = arith.constant dense<0.000000e+00> : vector<128x128xf32>
    %20 = tpu.matmul %18, %19, %cst_14 {dimension_numbers = #tpu.dot_dimension_numbers<[1], [0], [0], [1], [0, 0, 1, 1], [], []>} : vector<128x128xbf16>, vector<128x128xbf16>, vector<128x128xf32> -> vector<128x128xf32>
    %c0_15 = arith.constant 0 : index
    %c0_16 = arith.constant 0 : index
    %21 = vector.load %arg7[%c0_15, %c0_16] : memref<1x128xf32, #tpu.memory_space<vmem>>, vector<1x128xf32>
    %22 = vector.broadcast %21 : vector<1x128xf32> to vector<128x128xf32>
    %23 = arith.addf %20, %22 : vector<128x128xf32>
    %cst_17 = arith.constant 1.000000e-01 : f32
    %24 = vector.broadcast %cst_17 : f32 to vector<128x128xf32>
    %25 = arith.mulf %24, %23 : vector<128x128xf32>
    %26 = arith.maximumf %23, %25 : vector<128x128xf32>
    %27 = arith.truncf %26 : vector<128x128xf32> to vector<128x128xbf16>
    %c0_18 = arith.constant 0 : index
    %c0_19 = arith.constant 0 : index
    %28 = vector.load %arg8[%c0_18, %c0_19] : memref<128x128xbf16, #tpu.memory_space<vmem>>, vector<128x128xbf16>
    %cst_20 = arith.constant dense<0.000000e+00> : vector<128x128xf32>
    %29 = tpu.matmul %27, %28, %cst_20 {dimension_numbers = #tpu.dot_dimension_numbers<[1], [0], [0], [1], [0, 0, 1, 1], [], []>} : vector<128x128xbf16>, vector<128x128xbf16>, vector<128x128xf32> -> vector<128x128xf32>
    %c0_21 = arith.constant 0 : index
    %c0_22 = arith.constant 0 : index
    %30 = vector.load %arg9[%c0_21, %c0_22] : memref<1x128xf32, #tpu.memory_space<vmem>>, vector<1x128xf32>
    %31 = vector.broadcast %30 : vector<1x128xf32> to vector<128x128xf32>
    %32 = arith.addf %29, %31 : vector<128x128xf32>
    %cst_23 = arith.constant 1.000000e-01 : f32
    %33 = vector.broadcast %cst_23 : f32 to vector<128x128xf32>
    %34 = arith.mulf %33, %32 : vector<128x128xf32>
    %35 = arith.maximumf %32, %34 : vector<128x128xf32>
    %36 = arith.truncf %35 : vector<128x128xf32> to vector<128x128xbf16>
    %c0_24 = arith.constant 0 : index
    %c0_25 = arith.constant 0 : index
    %37 = vector.load %arg10[%c0_24, %c0_25] : memref<128x32xbf16, #tpu.memory_space<vmem>>, vector<128x32xbf16>
    %cst_26 = arith.constant dense<0.000000e+00> : vector<128x32xf32>
    %38 = tpu.matmul %36, %37, %cst_26 {dimension_numbers = #tpu.dot_dimension_numbers<[1], [0], [0], [1], [0, 0, 1, 1], [], []>} : vector<128x128xbf16>, vector<128x32xbf16>, vector<128x32xf32> -> vector<128x32xf32>
    %c0_27 = arith.constant 0 : index
    %c0_28 = arith.constant 0 : index
    %39 = vector.load %arg11[%c0_27, %c0_28] : memref<1x32xf32, #tpu.memory_space<vmem>>, vector<1x32xf32>
    %40 = vector.broadcast %39 : vector<1x32xf32> to vector<128x32xf32>
    %41 = arith.addf %38, %40 : vector<128x32xf32>
    %42 = vector.shape_cast %41 : vector<128x32xf32> to vector<2x64x32xf32>
    %cst_29 = arith.constant dense<0.000000e+00> : vector<2x32xf32>
    %43 = vector.multi_reduction <add>, %42, %cst_29 [1] : vector<2x64x32xf32> to vector<2x32xf32>
    %cst_30 = arith.constant 1.562500e-02 : f32
    %44 = vector.broadcast %cst_30 : f32 to vector<2x32xf32>
    %45 = arith.mulf %43, %44 : vector<2x32xf32>
    %46 = arith.truncf %45 : vector<2x32xf32> to vector<2x32xbf16>
    %c0_31 = arith.constant 0 : index
    %c0_32 = arith.constant 0 : index
    %47 = vector.load %arg12[%c0_31, %c0_32] : memref<32x128xbf16, #tpu.memory_space<vmem>>, vector<32x128xbf16>
    %cst_33 = arith.constant dense<0.000000e+00> : vector<2x128xf32>
    %48 = tpu.matmul %46, %47, %cst_33 {dimension_numbers = #tpu.dot_dimension_numbers<[1], [0], [0], [1], [0, 0, 1, 1], [], []>} : vector<2x32xbf16>, vector<32x128xbf16>, vector<2x128xf32> -> vector<2x128xf32>
    %c0_34 = arith.constant 0 : index
    %c0_35 = arith.constant 0 : index
    %49 = vector.load %arg13[%c0_34, %c0_35] : memref<1x128xf32, #tpu.memory_space<vmem>>, vector<1x128xf32>
    %50 = vector.broadcast %49 : vector<1x128xf32> to vector<2x128xf32>
    %51 = arith.addf %48, %50 : vector<2x128xf32>
    %c0_36 = arith.constant 0 : index
    %c0_37 = arith.constant 0 : index
    %52 = vector.load %arg14[%c0_36, %c0_37] : memref<2x128xf32, #tpu.memory_space<vmem>>, vector<2x128xf32>
    tpu.vector_store %arg14[%c0_36, %c0_37], %51 {strides = array<i32>} : memref<2x128xf32, #tpu.memory_space<vmem>>, vector<2x128xf32>,
    return
  }
  func.func @transform_0(%arg0: i32) -> (i32, i32) {
    %c0_i32 = arith.constant 0 : i32
    %c0_i32_0 = arith.constant 0 : i32
    return %arg0, %c0_i32 : i32, i32
  }
  func.func @transform_1(%arg0: i32) -> (i32, i32) {
    %c0_i32 = arith.constant 0 : i32
    %c0_i32_0 = arith.constant 0 : i32
    %c0_i32_1 = arith.constant 0 : i32
    return %c0_i32, %c0_i32_0 : i32, i32
  }
  func.func @transform_2(%arg0: i32) -> (i32, i32) {
    %c0_i32 = arith.constant 0 : i32
    %c0_i32_0 = arith.constant 0 : i32
    %c0_i32_1 = arith.constant 0 : i32
    return %c0_i32, %c0_i32_0 : i32, i32
  }
  func.func @transform_3(%arg0: i32) -> (i32, i32) {
    %c0_i32 = arith.constant 0 : i32
    %c0_i32_0 = arith.constant 0 : i32
    %c0_i32_1 = arith.constant 0 : i32
    return %c0_i32, %c0_i32_0 : i32, i32
  }
  func.func @transform_4(%arg0: i32) -> (i32, i32) {
    %c0_i32 = arith.constant 0 : i32
    %c0_i32_0 = arith.constant 0 : i32
    %c0_i32_1 = arith.constant 0 : i32
    return %c0_i32, %c0_i32_0 : i32, i32
  }
  func.func @transform_5(%arg0: i32) -> (i32, i32) {
    %c0_i32 = arith.constant 0 : i32
    %c0_i32_0 = arith.constant 0 : i32
    %c0_i32_1 = arith.constant 0 : i32
    return %c0_i32, %c0_i32_0 : i32, i32
  }
  func.func @transform_6(%arg0: i32) -> (i32, i32) {
    %c0_i32 = arith.constant 0 : i32
    %c0_i32_0 = arith.constant 0 : i32
    %c0_i32_1 = arith.constant 0 : i32
    return %c0_i32, %c0_i32_0 : i32, i32
  }
  func.func @transform_7(%arg0: i32) -> (i32, i32) {
    %c0_i32 = arith.constant 0 : i32
    %c0_i32_0 = arith.constant 0 : i32
    %c0_i32_1 = arith.constant 0 : i32
    return %c0_i32, %c0_i32_0 : i32, i32
  }
  func.func @transform_8(%arg0: i32) -> (i32, i32) {
    %c0_i32 = arith.constant 0 : i32
    %c0_i32_0 = arith.constant 0 : i32
    %c0_i32_1 = arith.constant 0 : i32
    return %c0_i32, %c0_i32_0 : i32, i32
  }
  func.func @transform_9(%arg0: i32) -> (i32, i32) {
    %c0_i32 = arith.constant 0 : i32
    %c0_i32_0 = arith.constant 0 : i32
    %c0_i32_1 = arith.constant 0 : i32
    return %c0_i32, %c0_i32_0 : i32, i32
  }
  func.func @transform_10(%arg0: i32) -> (i32, i32) {
    %c0_i32 = arith.constant 0 : i32
    %c0_i32_0 = arith.constant 0 : i32
    %c0_i32_1 = arith.constant 0 : i32
    return %c0_i32, %c0_i32_0 : i32, i32
  }
  func.func @transform_11(%arg0: i32) -> (i32, i32) {
    %c0_i32 = arith.constant 0 : i32
    %c0_i32_0 = arith.constant 0 : i32
    %c0_i32_1 = arith.constant 0 : i32
    return %c0_i32, %c0_i32_0 : i32, i32
  }
  func.func @transform_12(%arg0: i32) -> (i32, i32) {
    %c0_i32 = arith.constant 0 : i32
    %c0_i32_0 = arith.constant 0 : i32
    %c0_i32_1 = arith.constant 0 : i32
    return %c0_i32, %c0_i32_0 : i32, i32
  }
  func.func @transform_13(%arg0: i32) -> (i32, i32) {
    %c0_i32 = arith.constant 0 : i32
    %c0_i32_0 = arith.constant 0 : i32
    return %arg0, %c0_i32 : i32, i32
  }
}

</mosaic_0001>

<llo_original>
// kernel: tpu_custom_call.1
$region0: #{tpu_custom_call.1}
  #allocation0 [shape = 'u32[]', space=smem, size = 0x4, offset = 0x4, fixed_abs, tag = 'smem constant byte address 0x4 - core index']
  #allocation1 [shape = 'u32[144,128]{1,0:T(1,128)}', space=vmem, size = 0x12000, scoped, tag = 'internal scratch']
  %s0 = inlined_call_operand.vmem [shape: bf16[128,48], index: 0, kind: input, shape index: {}]
  %s1 = inlined_call_operand.hbm [shape: bf16[48,128], index: 1, kind: input, shape index: {}]
  %s2 = inlined_call_operand.vmem [shape: f32[1,128], index: 2, kind: input, shape index: {}]
  %s3 = inlined_call_operand.vmem [shape: bf16[128,128], index: 3, kind: input, shape index: {}]
  %s4 = inlined_call_operand.hbm [shape: f32[1,128], index: 4, kind: input, shape index: {}]
  %s5 = inlined_call_operand.vmem [shape: bf16[128,128], index: 5, kind: input, shape index: {}]
  %s6 = inlined_call_operand.hbm [shape: f32[1,128], index: 6, kind: input, shape index: {}]
  %s7 = inlined_call_operand.vmem [shape: bf16[128,128], index: 7, kind: input, shape index: {}]
  %s8 = inlined_call_operand.hbm [shape: f32[1,128], index: 8, kind: input, shape index: {}]
  %s9 = inlined_call_operand.vmem [shape: bf16[128,32], index: 9, kind: input, shape index: {}]
  %s10 = inlined_call_operand.hbm [shape: f32[1,32], index: 10, kind: input, shape index: {}]
  %s11 = inlined_call_operand.vmem [shape: bf16[32,128], index: 11, kind: input, shape index: {}]
  %s12 = inlined_call_operand.vmem [shape: f32[1,128], index: 12, kind: input, shape index: {}]
  %s13 = inlined_call_operand.hbm [shape: f32[2,128], index: 13, kind: output, shape index: {}]
  %s14 = sld [smem:[#allocation0]]
  $region82: #{tpu_custom_call.1} parent=0
    _
  %s16 = ssub.s32 1, %s14
  %s17 = scalar_select 0, %s16, %s14
  $region1: #{tpu_custom_call.1} parent=0
    #allocation2 [shape = 'u8[12288]{0}', space=vmem, size = 0x3000, scoped, tag = 'input window, operand 1, single buffered']
    #allocation3 [shape = 's32[1]{0}', space=sflag, size = 0x4, scoped, tag = 'scoped memory for tpu_custom_call.1']
    #allocation4 [shape = 's32[1]{0}', space=sflag, size = 0x4, scoped, tag = 'scoped memory for tpu_custom_call.1']
    #allocation5 [shape = 'u8[512]{0}', space=vmem, size = 0x400, scoped, tag = 'input window, operand 4, single buffered']
    #allocation6 [shape = 's32[1]{0}', space=sflag, size = 0x4, scoped, tag = 'scoped memory for tpu_custom_call.1']
    #allocation7 [shape = 'u8[512]{0}', space=vmem, size = 0x400, scoped, tag = 'input window, operand 6, single buffered']
    #allocation8 [shape = 'u8[512]{0}', space=vmem, size = 0x400, scoped, tag = 'input window, operand 8, single buffered']
    #allocation9 [shape = 's32[1]{0}', space=sflag, size = 0x4, scoped, tag = 'scoped memory for tpu_custom_call.1']
    #allocation10 [shape = 'u8[512]{0}', space=vmem, size = 0x400, scoped, tag = 'input window, operand 10, single buffered']
    #allocation11 [shape = 'u8[1024]{0}', space=vmem, size = 0x400, scoped, tag = 'output window, operand 0, single buffered']
    %18 = vsyncpa [#allocation3], 0
    %19 = vsyncpa [#allocation6], 0
    %20 = vsyncpa [#allocation9], 0
    %21 = vsyncpa [#allocation4], 0
    // Predicated region
    $region2: #{tpu_custom_call.1} parent=1 // pred_check
      _
    $region3: #{tpu_custom_call.1} parent=1 // pred_check_branch
      %23 = sbr.rel (0) target = $region5
    $region4: #{tpu_custom_call.1} parent=1 // pred_region
      _
    $region5: #{tpu_custom_call.1} parent=1 // pred_fallthru
      _
    // Predicated region
    $region6: #{tpu_custom_call.1} parent=1 // pred_check
      _
    $region7: #{tpu_custom_call.1} parent=1 // pred_check_branch
      %25 = sbr.rel (0) target = $region9
    $region8: #{tpu_custom_call.1} parent=1 // pred_region
      %s27 = ssub.s32 384, 384
      %28 = vsyncadd [#allocation3], %s27
      %s29 = sshll.u32 [#allocation2], 4
      %s30 = int_to_ptr.vmem [resolvable:$true] %s29
      %35 = dma.hbm_to_vmem [thread:$0]  %s1, 384, %s30, [#allocation3], 64, 64, 4
    $region9: #{tpu_custom_call.1} parent=1 // pred_fallthru
      _
    // Predicated region
    $region10: #{tpu_custom_call.1} parent=1 // pred_check
      _
    $region11: #{tpu_custom_call.1} parent=1 // pred_check_branch
      %37 = sbr.rel (0) target = $region13
    $region12: #{tpu_custom_call.1} parent=1 // pred_region
      _
    $region13: #{tpu_custom_call.1} parent=1 // pred_fallthru
      _
    // Predicated region
    $region14: #{tpu_custom_call.1} parent=1 // pred_check
      _
    $region15: #{tpu_custom_call.1} parent=1 // pred_check_branch
      %39 = sbr.rel (0) target = $region17
    $region16: #{tpu_custom_call.1} parent=1 // pred_region
      _
    $region17: #{tpu_custom_call.1} parent=1 // pred_fallthru
      _
    // Predicated region
    $region18: #{tpu_custom_call.1} parent=1 // pred_check
      _
    $region19: #{tpu_custom_call.1} parent=1 // pred_check_branch
      %41 = sbr.rel (0) target = $region21
    $region20: #{tpu_custom_call.1} parent=1 // pred_region
      %s43 = ssub.s32 16, 16
      %44 = vsyncadd [#allocation6], %s43
      %s46 = sshll.u32 [#allocation5], 4
      %s47 = int_to_ptr.vmem [resolvable:$true] %s46
      %49 = dma.hbm_to_vmem [thread:$0]  %s4, 16, %s47, [#allocation6]
    $region21: #{tpu_custom_call.1} parent=1 // pred_fallthru
      _
    // Predicated region
    $region22: #{tpu_custom_call.1} parent=1 // pred_check
      _
    $region23: #{tpu_custom_call.1} parent=1 // pred_check_branch
      %51 = sbr.rel (0) target = $region25
    $region24: #{tpu_custom_call.1} parent=1 // pred_region
      _
    $region25: #{tpu_custom_call.1} parent=1 // pred_fallthru
      _
    // Predicated region
    $region26: #{tpu_custom_call.1} parent=1 // pred_check
      _
    $region27: #{tpu_custom_call.1} parent=1 // pred_check_branch
      %53 = sbr.rel (0) target = $region29
    $region28: #{tpu_custom_call.1} parent=1 // pred_region
      %s55 = ssub.s32 16, 16
      %56 = vsyncadd [#allocation6], %s55
      %s58 = sshll.u32 [#allocation7], 4
      %s59 = int_to_ptr.vmem [resolvable:$true] %s58
      %61 = dma.hbm_to_vmem [thread:$0]  %s6, 16, %s59, [#allocation6]
    $region29: #{tpu_custom_call.1} parent=1 // pred_fallthru
      _
    // Predicated region
    $region30: #{tpu_custom_call.1} parent=1 // pred_check
      _
    $region31: #{tpu_custom_call.1} parent=1 // pred_check_branch
      %63 = sbr.rel (0) target = $region33
    $region32: #{tpu_custom_call.1} parent=1 // pred_region
      _
    $region33: #{tpu_custom_call.1} parent=1 // pred_fallthru
      _
    // Predicated region
    $region34: #{tpu_custom_call.1} parent=1 // pred_check
      _
    $region35: #{tpu_custom_call.1} parent=1 // pred_check_branch
      %65 = sbr.rel (0) target = $region37
    $region36: #{tpu_custom_call.1} parent=1 // pred_region
      %s67 = ssub.s32 16, 16
      %68 = vsyncadd [#allocation9], %s67
      %s70 = sshll.u32 [#allocation8], 4
      %s71 = int_to_ptr.vmem [resolvable:$true] %s70
      %73 = dma.hbm_to_vmem [thread:$0]  %s8, 16, %s71, [#allocation9]
    $region37: #{tpu_custom_call.1} parent=1 // pred_fallthru
      _
    // Predicated region
    $region38: #{tpu_custom_call.1} parent=1 // pred_check
      _
    $region39: #{tpu_custom_call.1} parent=1 // pred_check_branch
      %75 = sbr.rel (0) target = $region41
    $region40: #{tpu_custom_call.1} parent=1 // pred_region
      _
    $region41: #{tpu_custom_call.1} parent=1 // pred_fallthru
      _
    // Predicated region
    $region42: #{tpu_custom_call.1} parent=1 // pred_check
      _
    $region43: #{tpu_custom_call.1} parent=1 // pred_check_branch
      %77 = sbr.rel (0) target = $region45
    $region44: #{tpu_custom_call.1} parent=1 // pred_region
      %s79 = ssub.s32 16, 16
      %80 = vsyncadd [#allocation9], %s79
      %s82 = sshll.u32 [#allocation10], 4
      %s83 = int_to_ptr.vmem [resolvable:$true] %s82
      %85 = dma.hbm_to_vmem [thread:$0]  %s10, 16, %s83, [#allocation9]
    $region45: #{tpu_custom_call.1} parent=1 // pred_fallthru
      _
    // Predicated region
    $region46: #{tpu_custom_call.1} parent=1 // pred_check
      _
    $region47: #{tpu_custom_call.1} parent=1 // pred_check_branch
      %87 = sbr.rel (0) target = $region49
    $region48: #{tpu_custom_call.1} parent=1 // pred_region
      _
    $region49: #{tpu_custom_call.1} parent=1 // pred_fallthru
      _
    // Predicated region
    $region50: #{tpu_custom_call.1} parent=1 // pred_check
      _
    $region51: #{tpu_custom_call.1} parent=1 // pred_check_branch
      %89 = sbr.rel (0) target = $region53
    $region52: #{tpu_custom_call.1} parent=1 // pred_region
      _
    $region53: #{tpu_custom_call.1} parent=1 // pred_fallthru
      _
    // Predicated region
    $region54: #{tpu_custom_call.1} parent=1 // pred_check
      _
    $region55: #{tpu_custom_call.1} parent=1 // pred_check_branch
      %91 = sbr.rel (0) target = $region57
    $region56: #{tpu_custom_call.1} parent=1 // pred_region
      %92 = dma.done [#allocation3], 384
    $region57: #{tpu_custom_call.1} parent=1 // pred_fallthru
      _
    // Predicated region
    $region58: #{tpu_custom_call.1} parent=1 // pred_check
      _
    $region59: #{tpu_custom_call.1} parent=1 // pred_check_branch
      %94 = sbr.rel (0) target = $region61
    $region60: #{tpu_custom_call.1} parent=1 // pred_region
      %95 = dma.done [#allocation6], 16
    $region61: #{tpu_custom_call.1} parent=1 // pred_fallthru
      _
    // Predicated region
    $region62: #{tpu_custom_call.1} parent=1 // pred_check
      _
    $region63: #{tpu_custom_call.1} parent=1 // pred_check_branch
      %97 = sbr.rel (0) target = $region65
    $region64: #{tpu_custom_call.1} parent=1 // pred_region
      %98 = dma.done [#allocation6], 16
    $region65: #{tpu_custom_call.1} parent=1 // pred_fallthru
      _
    // Predicated region
    $region66: #{tpu_custom_call.1} parent=1 // pred_check
      _
    $region67: #{tpu_custom_call.1} parent=1 // pred_check_branch
      %100 = sbr.rel (0) target = $region69
    $region68: #{tpu_custom_call.1} parent=1 // pred_region
      %101 = dma.done [#allocation9], 16
    $region69: #{tpu_custom_call.1} parent=1 // pred_fallthru
      _
    // Predicated region
    $region70: #{tpu_custom_call.1} parent=1 // pred_check
      _
    $region71: #{tpu_custom_call.1} parent=1 // pred_check_branch
      %103 = sbr.rel (0) target = $region73
    $region72: #{tpu_custom_call.1} parent=1 // pred_region
      %104 = dma.done [#allocation9], 16
    $region73: #{tpu_custom_call.1} parent=1 // pred_fallthru
      _
    %v106 = vld [vmem:[%s0] sm:$0xf]
    %v107 = vld [vmem:[%s0 + $0x4] sm:$0xf]
    %v108 = vld [vmem:[%s0 + $0x8] sm:$0xf]
    %v109 = vld [vmem:[%s0 + $0xc] sm:$0xf]
    %v110 = vld [vmem:[%s0 + $0x10] sm:$0xf]
    %v111 = vld [vmem:[%s0 + $0x14] sm:$0xf]
    %v112 = vld [vmem:[%s0 + $0x18] sm:$0xf]
    %v113 = vld [vmem:[%s0 + $0x1c] sm:$0xf]
    %v114 = vld [vmem:[%s0 + $0x20] sm:$0xf]
    %v115 = vld [vmem:[%s0 + $0x24] sm:$0xf]
    %v116 = vld [vmem:[%s0 + $0x28] sm:$0xf]
    %v117 = vld [vmem:[%s0 + $0x2c] sm:$0xf]
    %v118 = vld [vmem:[%s0 + $0x30] sm:$0xf]
    %v119 = vld [vmem:[%s0 + $0x34] sm:$0xf]
    %v120 = vld [vmem:[%s0 + $0x38] sm:$0xf]
    %v121 = vld [vmem:[%s0 + $0x3c] sm:$0xf]
    %v122 = vld [vmem:[#allocation2] sm:$0xf]
    %v123 = vld [vmem:[#allocation2 + $0x4] sm:$0xf]
    %v124 = vld [vmem:[#allocation2 + $0x8] sm:$0xf]
    %v125 = vld [vmem:[#allocation2 + $0xc] sm:$0xf]
    %v126 = vld [vmem:[#allocation2 + $0x10] sm:$0xf]
    %v127 = vld [vmem:[#allocation2 + $0x14] sm:$0xf]
    %v128 = vld [vmem:[%s2] sm:$0x1]
    %v130 = vlaneseq
    %v131 = vshrl.u32 %v130, 7
    %v132 = vsub.s32 0, %v131
    %v133 = vrot.slane %v128, %v132
    %v151 = vunpack.c.l.b16 %v106
    %v152 = vunpack.c.l.b16 %v107
    %v153 = vunpack.c.l.b16 %v108
    %v154 = vunpack.c.l.b16 %v109
    %v155 = vunpack.c.l.b16 %v110
    %v156 = vunpack.c.l.b16 %v111
    %v157 = vunpack.c.l.b16 %v112
    %v158 = vunpack.c.l.b16 %v113
    %v159 = vunpack.c.l.b16 %v114
    %v160 = vunpack.c.l.b16 %v115
    %v161 = vunpack.c.l.b16 %v116
    %v162 = vunpack.c.l.b16 %v117
    %v163 = vunpack.c.l.b16 %v118
    %v164 = vunpack.c.l.b16 %v119
    %v165 = vunpack.c.l.b16 %v120
    %v166 = vunpack.c.l.b16 %v121
    %v167 = vpack.c.b16 %v152, %v151
    %v168 = vpack.c.b16 %v154, %v153
    %v169 = vpack.c.b16 %v156, %v155
    %v170 = vpack.c.b16 %v158, %v157
    %v171 = vpack.c.b16 %v160, %v159
    %v172 = vpack.c.b16 %v162, %v161
    %v173 = vpack.c.b16 %v164, %v163
    %v174 = vpack.c.b16 %v166, %v165
    %v181 = vunpack.c.l.b16 %v122
    %v182 = vunpack.c.l.b16 %v123
    %v183 = vunpack.c.l.b16 %v124
    %v184 = vunpack.c.l.b16 %v125
    %v185 = vunpack.c.l.b16 %v126
    %v186 = vunpack.c.l.b16 %v127
    %v187 = vpack.c.b16 %v182, %v181
    %v188 = vpack.c.b16 %v184, %v183
    %v189 = vpack.c.b16 %v186, %v185
    %vm193 = vcmask 392192
    %v195 = vsel %vm193, %v167, 0
    %v198 = vsel %vm193, %v168, 0
    %v201 = vsel %vm193, %v169, 0
    %v204 = vsel %vm193, %v170, 0
    %v207 = vsel %vm193, %v171, 0
    %v210 = vsel %vm193, %v172, 0
    %v213 = vsel %vm193, %v173, 0
    %v216 = vsel %vm193, %v174, 0
    %218 = vmatprep.subr.bf16.mxu0 0
    %219 = vmatpush1.bf16.msra.mxu0 %v187
    %220 = vmatprep.subr.bf16.mxu0 0
    %221 = vmatpush1.bf16.msra.mxu0 %v188
    %222 = vmatprep.subr.bf16.mxu0 0
    %223 = vmatpush1.bf16.msra.mxu0 %v189
    %224 = vmatprep.subr.bf16.mxu0 0
    %225 = vmatpush1.bf16.msra.mxu0 0
    %226 = vmatprep.subr.bf16.mxu0 0
    %227 = vmatpush1.bf16.msra.mxu0 0
    %228 = vmatprep.subr.bf16.mxu0 0
    %229 = vmatpush1.bf16.msra.mxu0 0
    %230 = vmatprep.subr.bf16.mxu0 0
    %231 = vmatpush1.bf16.msra.mxu0 0
    %232 = vmatprep.subr.bf16.mxu0 0
    %233 = vmatpush1.bf16.msra.mxu0 0
    %234 = vmatprep.subr.bf16.mxu0 0
    %235 = vmatpush1.bf16.msra.mxu0 0
    %236 = vmatprep.subr.bf16.mxu0 0
    %237 = vmatpush1.bf16.msra.mxu0 0
    %238 = vmatprep.subr.bf16.mxu0 0
    %239 = vmatpush1.bf16.msra.mxu0 0
    %240 = vmatprep.subr.bf16.mxu0 0
    %241 = vmatpush1.bf16.msra.mxu0 0
    %242 = vmatprep.subr.bf16.mxu0 0
    %243 = vmatpush1.bf16.msra.mxu0 0
    %244 = vmatprep.subr.bf16.mxu0 0
    %245 = vmatpush1.bf16.msra.mxu0 0
    %246 = vmatprep.subr.bf16.mxu0 0
    %247 = vmatpush1.bf16.msra.mxu0 0
    %248 = vmatprep.subr.bf16.mxu0 0
    %249 = vmatpush1.bf16.msra.mxu0 0
    %250 = vmatprep.mubr.bf16.mxu0 0
    %251 = vmatmul.mubr.bf16.gmra.mrb[0].mxu0 %v195
    %v252 = vpop.f32.mrb[0].mxu0
    %v253 = vadd.f32 %v133, %v252
    %v254 = vpop.f32.mrb[0].mxu0
    %v255 = vpop.f32.mrb[0].mxu0
    %v256 = vadd.f32 %v133, %v255
    %v257 = vpop.f32.mrb[0].mxu0
    %258 = vmatprep.mubr.bf16.mxu0 0
    %259 = vmatmul.mubr.bf16.gmra.mrb[0].mxu0 %v198
    %v260 = vpop.f32.mrb[0].mxu0
    %v261 = vadd.f32 %v133, %v260
    %v262 = vpop.f32.mrb[0].mxu0
    %v263 = vpop.f32.mrb[0].mxu0
    %v264 = vadd.f32 %v133, %v263
    %v265 = vpop.f32.mrb[0].mxu0
    %266 = vmatprep.mubr.bf16.mxu0 0
    %267 = vmatmul.mubr.bf16.gmra.mrb[0].mxu0 %v201
    %v268 = vpop.f32.mrb[0].mxu0
    %v269 = vadd.f32 %v133, %v268
    %v270 = vpop.f32.mrb[0].mxu0
    %v271 = vpop.f32.mrb[0].mxu0
    %v272 = vadd.f32 %v133, %v271
    %v273 = vpop.f32.mrb[0].mxu0
    %274 = vmatprep.mubr.bf16.mxu0 0
    %275 = vmatmul.mubr.bf16.gmra.mrb[0].mxu0 %v204
    %v276 = vpop.f32.mrb[0].mxu0
    %v277 = vadd.f32 %v133, %v276
    %v278 = vpop.f32.mrb[0].mxu0
    %v279 = vpop.f32.mrb[0].mxu0
    %v280 = vadd.f32 %v133, %v279
    %v281 = vpop.f32.mrb[0].mxu0
    %282 = vmatprep.mubr.bf16.mxu0 0
    %283 = vmatmul.mubr.bf16.gmra.mrb[0].mxu0 %v207
    %v284 = vpop.f32.mrb[0].mxu0
    %v285 = vadd.f32 %v133, %v284
    %v286 = vpop.f32.mrb[0].mxu0
    %v287 = vpop.f32.mrb[0].mxu0
    %v288 = vadd.f32 %v133, %v287
    %v289 = vpop.f32.mrb[0].mxu0
    %290 = vmatprep.mubr.bf16.mxu0 0
    %291 = vmatmul.mubr.bf16.gmra.mrb[0].mxu0 %v210
    %v292 = vpop.f32.mrb[0].mxu0
    %v293 = vadd.f32 %v133, %v292
    %v294 = vpop.f32.mrb[0].mxu0
    %v295 = vpop.f32.mrb[0].mxu0
    %v296 = vadd.f32 %v133, %v295
    %v297 = vpop.f32.mrb[0].mxu0
    %298 = vmatprep.mubr.bf16.mxu0 0
    %299 = vmatmul.mubr.bf16.gmra.mrb[0].mxu0 %v213
    %v300 = vpop.f32.mrb[0].mxu0
    %v301 = vadd.f32 %v133, %v300
    %v302 = vpop.f32.mrb[0].mxu0
    %v303 = vpop.f32.mrb[0].mxu0
    %v304 = vadd.f32 %v133, %v303
    %v305 = vpop.f32.mrb[0].mxu0
    %306 = vmatprep.mubr.bf16.mxu0 0
    %307 = vmatmul.mubr.bf16.gmra.mrb[0].mxu0 %v216
    %v308 = vpop.f32.mrb[0].mxu0
    %v309 = vadd.f32 %v133, %v308
    %v310 = vpop.f32.mrb[0].mxu0
    %v311 = vpop.f32.mrb[0].mxu0
    %v312 = vadd.f32 %v133, %v311
    %v313 = vpop.f32.mrb[0].mxu0
    %314 = vdwg.mxu0
    %v315 = vmul.f32 %v253, 0.1
    %v316 = vmul.f32 %v256, 0.1
    %v317 = vmul.f32 %v261, 0.1
    %v318 = vmul.f32 %v264, 0.1
    %v319 = vmul.f32 %v269, 0.1
    %v320 = vmul.f32 %v272, 0.1
    %v321 = vmul.f32 %v277, 0.1
    %v322 = vmul.f32 %v280, 0.1
    %v323 = vmul.f32 %v285, 0.1
    %v324 = vmul.f32 %v288, 0.1
    %v325 = vmul.f32 %v293, 0.1
    %v326 = vmul.f32 %v296, 0.1
    %v327 = vmul.f32 %v301, 0.1
    %v328 = vmul.f32 %v304, 0.1
    %v329 = vmul.f32 %v309, 0.1
    %v330 = vmul.f32 %v312, 0.1
    %v331 = vmax.f32 %v253, %v315
    %v332 = vmax.f32 %v256, %v316
    %v333 = vmax.f32 %v261, %v317
    %v334 = vmax.f32 %v264, %v318
    %v335 = vmax.f32 %v269, %v319
    %v336 = vmax.f32 %v272, %v320
    %v337 = vmax.f32 %v277, %v321
    %v338 = vmax.f32 %v280, %v322
    %v339 = vmax.f32 %v285, %v323
    %v340 = vmax.f32 %v288, %v324
    %v341 = vmax.f32 %v293, %v325
    %v342 = vmax.f32 %v296, %v326
    %v343 = vmax.f32 %v301, %v327
    %v344 = vmax.f32 %v304, %v328
    %v345 = vmax.f32 %v309, %v329
    %v346 = vmax.f32 %v312, %v330
    %v347 = vpack.c.bf16 %v332, %v331
    %v348 = vpack.c.bf16 %v334, %v333
    %v349 = vpack.c.bf16 %v336, %v335
    %v350 = vpack.c.bf16 %v338, %v337
    %v351 = vpack.c.bf16 %v340, %v339
    %v352 = vpack.c.bf16 %v342, %v341
    %v353 = vpack.c.bf16 %v344, %v343
    %v354 = vpack.c.bf16 %v346, %v345
    %v355 = vld [vmem:[%s3] sm:$0xf]
    %v356 = vld [vmem:[%s3 + $0x4] sm:$0xf]
    %v357 = vld [vmem:[%s3 + $0x8] sm:$0xf]
    %v358 = vld [vmem:[%s3 + $0xc] sm:$0xf]
    %v359 = vld [vmem:[%s3 + $0x10] sm:$0xf]
    %v360 = vld [vmem:[%s3 + $0x14] sm:$0xf]
    %v361 = vld [vmem:[%s3 + $0x18] sm:$0xf]
    %v362 = vld [vmem:[%s3 + $0x1c] sm:$0xf]
    %v363 = vld [vmem:[%s3 + $0x20] sm:$0xf]
    %v364 = vld [vmem:[%s3 + $0x24] sm:$0xf]
    %v365 = vld [vmem:[%s3 + $0x28] sm:$0xf]
    %v366 = vld [vmem:[%s3 + $0x2c] sm:$0xf]
    %v367 = vld [vmem:[%s3 + $0x30] sm:$0xf]
    %v368 = vld [vmem:[%s3 + $0x34] sm:$0xf]
    %v369 = vld [vmem:[%s3 + $0x38] sm:$0xf]
    %v370 = vld [vmem:[%s3 + $0x3c] sm:$0xf]
    %v371 = vld [vmem:[#allocation5] sm:$0x1]
    %v373 = vlaneseq
    %v374 = vshrl.u32 %v373, 7
    %v375 = vsub.s32 0, %v374
    %v376 = vrot.slane %v371, %v375
    %v394 = vunpack.c.l.b16 %v355
    %v395 = vunpack.c.l.b16 %v356
    %v396 = vunpack.c.l.b16 %v357
    %v397 = vunpack.c.l.b16 %v358
    %v398 = vunpack.c.l.b16 %v359
    %v399 = vunpack.c.l.b16 %v360
    %v400 = vunpack.c.l.b16 %v361
    %v401 = vunpack.c.l.b16 %v362
    %v402 = vunpack.c.l.b16 %v363
    %v403 = vunpack.c.l.b16 %v364
    %v404 = vunpack.c.l.b16 %v365
    %v405 = vunpack.c.l.b16 %v366
    %v406 = vunpack.c.l.b16 %v367
    %v407 = vunpack.c.l.b16 %v368
    %v408 = vunpack.c.l.b16 %v369
    %v409 = vunpack.c.l.b16 %v370
    %v410 = vpack.c.b16 %v395, %v394
    %v411 = vpack.c.b16 %v397, %v396
    %v412 = vpack.c.b16 %v399, %v398
    %v413 = vpack.c.b16 %v401, %v400
    %v414 = vpack.c.b16 %v403, %v402
    %v415 = vpack.c.b16 %v405, %v404
    %v416 = vpack.c.b16 %v407, %v406
    %v417 = vpack.c.b16 %v409, %v408
    %426 = vmatprep.subr.bf16.mxu0 0
    %427 = vmatpush1.bf16.msra.mxu0 %v410
    %428 = vmatprep.subr.bf16.mxu0 0
    %429 = vmatpush1.bf16.msra.mxu0 %v411
    %430 = vmatprep.subr.bf16.mxu0 0
    %431 = vmatpush1.bf16.msra.mxu0 %v412
    %432 = vmatprep.subr.bf16.mxu0 0
    %433 = vmatpush1.bf16.msra.mxu0 %v413
    %434 = vmatprep.subr.bf16.mxu0 0
    %435 = vmatpush1.bf16.msra.mxu0 %v414
    %436 = vmatprep.subr.bf16.mxu0 0
    %437 = vmatpush1.bf16.msra.mxu0 %v415
    %438 = vmatprep.subr.bf16.mxu0 0
    %439 = vmatpush1.bf16.msra.mxu0 %v416
    %440 = vmatprep.subr.bf16.mxu0 0
    %441 = vmatpush1.bf16.msra.mxu0 %v417
    %442 = vmatprep.subr.bf16.mxu0 0
    %443 = vmatpush1.bf16.msra.mxu0 0
    %444 = vmatprep.subr.bf16.mxu0 0
    %445 = vmatpush1.bf16.msra.mxu0 0
    %446 = vmatprep.subr.bf16.mxu0 0
    %447 = vmatpush1.bf16.msra.mxu0 0
    %448 = vmatprep.subr.bf16.mxu0 0
    %449 = vmatpush1.bf16.msra.mxu0 0
    %450 = vmatprep.subr.bf16.mxu0 0
    %451 = vmatpush1.bf16.msra.mxu0 0
    %452 = vmatprep.subr.bf16.mxu0 0
    %453 = vmatpush1.bf16.msra.mxu0 0
    %454 = vmatprep.subr.bf16.mxu0 0
    %455 = vmatpush1.bf16.msra.mxu0 0
    %456 = vmatprep.subr.bf16.mxu0 0
    %457 = vmatpush1.bf16.msra.mxu0 0
    %458 = vmatprep.mubr.bf16.mxu0 0
    %459 = vmatmul.mubr.bf16.gmra.mrb[0].mxu0 %v347
    %v460 = vpop.f32.mrb[0].mxu0
    %v461 = vadd.f32 %v376, %v460
    %v462 = vpop.f32.mrb[0].mxu0
    %v463 = vpop.f32.mrb[0].mxu0
    %v464 = vadd.f32 %v376, %v463
    %v465 = vpop.f32.mrb[0].mxu0
    %466 = vmatprep.mubr.bf16.mxu0 0
    %467 = vmatmul.mubr.bf16.gmra.mrb[0].mxu0 %v348
    %v468 = vpop.f32.mrb[0].mxu0
    %v469 = vadd.f32 %v376, %v468
    %v470 = vpop.f32.mrb[0].mxu0
    %v471 = vpop.f32.mrb[0].mxu0
    %v472 = vadd.f32 %v376, %v471
    %v473 = vpop.f32.mrb[0].mxu0
    %474 = vmatprep.mubr.bf16.mxu0 0
    %475 = vmatmul.mubr.bf16.gmra.mrb[0].mxu0 %v349
    %v476 = vpop.f32.mrb[0].mxu0
    %v477 = vadd.f32 %v376, %v476
    %v478 = vpop.f32.mrb[0].mxu0
    %v479 = vpop.f32.mrb[0].mxu0
    %v480 = vadd.f32 %v376, %v479
    %v481 = vpop.f32.mrb[0].mxu0
    %482 = vmatprep.mubr.bf16.mxu0 0
    %483 = vmatmul.mubr.bf16.gmra.mrb[0].mxu0 %v350
    %v484 = vpop.f32.mrb[0].mxu0
    %v485 = vadd.f32 %v376, %v484
    %v486 = vpop.f32.mrb[0].mxu0
    %v487 = vpop.f32.mrb[0].mxu0
    %v488 = vadd.f32 %v376, %v487
    %v489 = vpop.f32.mrb[0].mxu0
    %490 = vmatprep.mubr.bf16.mxu0 0
    %491 = vmatmul.mubr.bf16.gmra.mrb[0].mxu0 %v351
    %v492 = vpop.f32.mrb[0].mxu0
    %v493 = vadd.f32 %v376, %v492
    %v494 = vpop.f32.mrb[0].mxu0
    %v495 = vpop.f32.mrb[0].mxu0
    %v496 = vadd.f32 %v376, %v495
    %v497 = vpop.f32.mrb[0].mxu0
    %498 = vmatprep.mubr.bf16.mxu0 0
    %499 = vmatmul.mubr.bf16.gmra.mrb[0].mxu0 %v352
    %v500 = vpop.f32.mrb[0].mxu0
    %v501 = vadd.f32 %v376, %v500
    %v502 = vpop.f32.mrb[0].mxu0
    %v503 = vpop.f32.mrb[0].mxu0
    %v504 = vadd.f32 %v376, %v503
    %v505 = vpop.f32.mrb[0].mxu0
    %506 = vmatprep.mubr.bf16.mxu0 0
    %507 = vmatmul.mubr.bf16.gmra.mrb[0].mxu0 %v353
    %v508 = vpop.f32.mrb[0].mxu0
    %v509 = vadd.f32 %v376, %v508
    %v510 = vpop.f32.mrb[0].mxu0
    %v511 = vpop.f32.mrb[0].mxu0
    %v512 = vadd.f32 %v376, %v511
    %v513 = vpop.f32.mrb[0].mxu0
    %514 = vmatprep.mubr.bf16.mxu0 0
    %515 = vmatmul.mubr.bf16.gmra.mrb[0].mxu0 %v354
    %v516 = vpop.f32.mrb[0].mxu0
    %v517 = vadd.f32 %v376, %v516
    %v518 = vpop.f32.mrb[0].mxu0
    %v519 = vpop.f32.mrb[0].mxu0
    %v520 = vadd.f32 %v376, %v519
    %v521 = vpop.f32.mrb[0].mxu0
    %522 = vdwg.mxu0
    %v523 = vmul.f32 %v461, 0.1
    %v524 = vmul.f32 %v464, 0.1
    %v525 = vmul.f32 %v469, 0.1
    %v526 = vmul.f32 %v472, 0.1
    %v527 = vmul.f32 %v477, 0.1
    %v528 = vmul.f32 %v480, 0.1
    %v529 = vmul.f32 %v485, 0.1
    %v530 = vmul.f32 %v488, 0.1
    %v531 = vmul.f32 %v493, 0.1
    %v532 = vmul.f32 %v496, 0.1
    %v533 = vmul.f32 %v501, 0.1
    %v534 = vmul.f32 %v504, 0.1
    %v535 = vmul.f32 %v509, 0.1
    %v536 = vmul.f32 %v512, 0.1
    %v537 = vmul.f32 %v517, 0.1
    %v538 = vmul.f32 %v520, 0.1
    %v539 = vmax.f32 %v461, %v523
    %v540 = vmax.f32 %v464, %v524
    %v541 = vmax.f32 %v469, %v525
    %v542 = vmax.f32 %v472, %v526
    %v543 = vmax.f32 %v477, %v527
    %v544 = vmax.f32 %v480, %v528
    %v545 = vmax.f32 %v485, %v529
    %v546 = vmax.f32 %v488, %v530
    %v547 = vmax.f32 %v493, %v531
    %v548 = vmax.f32 %v496, %v532
    %v549 = vmax.f32 %v501, %v533
    %v550 = vmax.f32 %v504, %v534
    %v551 = vmax.f32 %v509, %v535
    %v552 = vmax.f32 %v512, %v536
    %v553 = vmax.f32 %v517, %v537
    %v554 = vmax.f32 %v520, %v538
    %v555 = vpack.c.bf16 %v540, %v539
    %v556 = vpack.c.bf16 %v542, %v541
    %v557 = vpack.c.bf16 %v544, %v543
    %v558 = vpack.c.bf16 %v546, %v545
    %v559 = vpack.c.bf16 %v548, %v547
    %v560 = vpack.c.bf16 %v550, %v549
    %v561 = vpack.c.bf16 %v552, %v551
    %v562 = vpack.c.bf16 %v554, %v553
    %v563 = vld [vmem:[%s5] sm:$0xf]
    %v564 = vld [vmem:[%s5 + $0x4] sm:$0xf]
    %v565 = vld [vmem:[%s5 + $0x8] sm:$0xf]
    %v566 = vld [vmem:[%s5 + $0xc] sm:$0xf]
    %v567 = vld [vmem:[%s5 + $0x10] sm:$0xf]
    %v568 = vld [vmem:[%s5 + $0x14] sm:$0xf]
    %v569 = vld [vmem:[%s5 + $0x18] sm:$0xf]
    %v570 = vld [vmem:[%s5 + $0x1c] sm:$0xf]
    %v571 = vld [vmem:[%s5 + $0x20] sm:$0xf]
    %v572 = vld [vmem:[%s5 + $0x24] sm:$0xf]
    %v573 = vld [vmem:[%s5 + $0x28] sm:$0xf]
    %v574 = vld [vmem:[%s5 + $0x2c] sm:$0xf]
    %v575 = vld [vmem:[%s5 + $0x30] sm:$0xf]
    %v576 = vld [vmem:[%s5 + $0x34] sm:$0xf]
    %v577 = vld [vmem:[%s5 + $0x38] sm:$0xf]
    %v578 = vld [vmem:[%s5 + $0x3c] sm:$0xf]
    %v579 = vld [vmem:[#allocation7] sm:$0x1]
    %v581 = vlaneseq
    %v582 = vshrl.u32 %v581, 7
    %v583 = vsub.s32 0, %v582
    %v584 = vrot.slane %v579, %v583
    %v602 = vunpack.c.l.b16 %v563
    %v603 = vunpack.c.l.b16 %v564
    %v604 = vunpack.c.l.b16 %v565
    %v605 = vunpack.c.l.b16 %v566
    %v606 = vunpack.c.l.b16 %v567
    %v607 = vunpack.c.l.b16 %v568
    %v608 = vunpack.c.l.b16 %v569
    %v609 = vunpack.c.l.b16 %v570
    %v610 = vunpack.c.l.b16 %v571
    %v611 = vunpack.c.l.b16 %v572
    %v612 = vunpack.c.l.b16 %v573
    %v613 = vunpack.c.l.b16 %v574
    %v614 = vunpack.c.l.b16 %v575
    %v615 = vunpack.c.l.b16 %v576
    %v616 = vunpack.c.l.b16 %v577
    %v617 = vunpack.c.l.b16 %v578
    %v618 = vpack.c.b16 %v603, %v602
    %v619 = vpack.c.b16 %v605, %v604
    %v620 = vpack.c.b16 %v607, %v606
    %v621 = vpack.c.b16 %v609, %v608
    %v622 = vpack.c.b16 %v611, %v610
    %v623 = vpack.c.b16 %v613, %v612
    %v624 = vpack.c.b16 %v615, %v614
    %v625 = vpack.c.b16 %v617, %v616
    %634 = vmatprep.subr.bf16.mxu0 0
    %635 = vmatpush1.bf16.msra.mxu0 %v618
    %636 = vmatprep.subr.bf16.mxu0 0
    %637 = vmatpush1.bf16.msra.mxu0 %v619
    %638 = vmatprep.subr.bf16.mxu0 0
    %639 = vmatpush1.bf16.msra.mxu0 %v620
    %640 = vmatprep.subr.bf16.mxu0 0
    %641 = vmatpush1.bf16.msra.mxu0 %v621
    %642 = vmatprep.subr.bf16.mxu0 0
    %643 = vmatpush1.bf16.msra.mxu0 %v622
    %644 = vmatprep.subr.bf16.mxu0 0
    %645 = vmatpush1.bf16.msra.mxu0 %v623
    %646 = vmatprep.subr.bf16.mxu0 0
    %647 = vmatpush1.bf16.msra.mxu0 %v624
    %648 = vmatprep.subr.bf16.mxu0 0
    %649 = vmatpush1.bf16.msra.mxu0 %v625
    %650 = vmatprep.subr.bf16.mxu0 0
    %651 = vmatpush1.bf16.msra.mxu0 0
    %652 = vmatprep.subr.bf16.mxu0 0
    %653 = vmatpush1.bf16.msra.mxu0 0
    %654 = vmatprep.subr.bf16.mxu0 0
    %655 = vmatpush1.bf16.msra.mxu0 0
    %656 = vmatprep.subr.bf16.mxu0 0
    %657 = vmatpush1.bf16.msra.mxu0 0
    %658 = vmatprep.subr.bf16.mxu0 0
    %659 = vmatpush1.bf16.msra.mxu0 0
    %660 = vmatprep.subr.bf16.mxu0 0
    %661 = vmatpush1.bf16.msra.mxu0 0
    %662 = vmatprep.subr.bf16.mxu0 0
    %663 = vmatpush1.bf16.msra.mxu0 0
    %664 = vmatprep.subr.bf16.mxu0 0
    %665 = vmatpush1.bf16.msra.mxu0 0
    %666 = vmatprep.mubr.bf16.mxu0 0
    %667 = vmatmul.mubr.bf16.gmra.mrb[0].mxu0 %v555
    %v668 = vpop.f32.mrb[0].mxu0
    %v669 = vadd.f32 %v584, %v668
    %v670 = vpop.f32.mrb[0].mxu0
    %v671 = vpop.f32.mrb[0].mxu0
    %v672 = vadd.f32 %v584, %v671
    %v673 = vpop.f32.mrb[0].mxu0
    %674 = vmatprep.mubr.bf16.mxu0 0
    %675 = vmatmul.mubr.bf16.gmra.mrb[0].mxu0 %v556
    %v676 = vpop.f32.mrb[0].mxu0
    %v677 = vadd.f32 %v584, %v676
    %v678 = vpop.f32.mrb[0].mxu0
    %v679 = vpop.f32.mrb[0].mxu0
    %v680 = vadd.f32 %v584, %v679
    %v681 = vpop.f32.mrb[0].mxu0
    %682 = vmatprep.mubr.bf16.mxu0 0
    %683 = vmatmul.mubr.bf16.gmra.mrb[0].mxu0 %v557
    %v684 = vpop.f32.mrb[0].mxu0
    %v685 = vadd.f32 %v584, %v684
    %v686 = vpop.f32.mrb[0].mxu0
    %v687 = vpop.f32.mrb[0].mxu0
    %v688 = vadd.f32 %v584, %v687
    %v689 = vpop.f32.mrb[0].mxu0
    %690 = vmatprep.mubr.bf16.mxu0 0
    %691 = vmatmul.mubr.bf16.gmra.mrb[0].mxu0 %v558
    %v692 = vpop.f32.mrb[0].mxu0
    %v693 = vadd.f32 %v584, %v692
    %v694 = vpop.f32.mrb[0].mxu0
    %v695 = vpop.f32.mrb[0].mxu0
    %v696 = vadd.f32 %v584, %v695
    %v697 = vpop.f32.mrb[0].mxu0
    %698 = vmatprep.mubr.bf16.mxu0 0
    %699 = vmatmul.mubr.bf16.gmra.mrb[0].mxu0 %v559
    %v700 = vpop.f32.mrb[0].mxu0
    %v701 = vadd.f32 %v584, %v700
    %v702 = vpop.f32.mrb[0].mxu0
    %v703 = vpop.f32.mrb[0].mxu0
    %v704 = vadd.f32 %v584, %v703
    %v705 = vpop.f32.mrb[0].mxu0
    %706 = vmatprep.mubr.bf16.mxu0 0
    %707 = vmatmul.mubr.bf16.gmra.mrb[0].mxu0 %v560
    %v708 = vpop.f32.mrb[0].mxu0
    %v709 = vadd.f32 %v584, %v708
    %v710 = vpop.f32.mrb[0].mxu0
    %v711 = vpop.f32.mrb[0].mxu0
    %v712 = vadd.f32 %v584, %v711
    %v713 = vpop.f32.mrb[0].mxu0
    %714 = vmatprep.mubr.bf16.mxu0 0
    %715 = vmatmul.mubr.bf16.gmra.mrb[0].mxu0 %v561
    %v716 = vpop.f32.mrb[0].mxu0
    %v717 = vadd.f32 %v584, %v716
    %v718 = vpop.f32.mrb[0].mxu0
    %v719 = vpop.f32.mrb[0].mxu0
    %v720 = vadd.f32 %v584, %v719
    %v721 = vpop.f32.mrb[0].mxu0
    %722 = vmatprep.mubr.bf16.mxu0 0
    %723 = vmatmul.mubr.bf16.gmra.mrb[0].mxu0 %v562
    %v724 = vpop.f32.mrb[0].mxu0
    %v725 = vadd.f32 %v584, %v724
    %v726 = vpop.f32.mrb[0].mxu0
    %v727 = vpop.f32.mrb[0].mxu0
    %v728 = vadd.f32 %v584, %v727
    %v729 = vpop.f32.mrb[0].mxu0
    %730 = vdwg.mxu0
    %v731 = vmul.f32 %v669, 0.1
    %v732 = vmul.f32 %v672, 0.1
    %v733 = vmul.f32 %v677, 0.1
    %v734 = vmul.f32 %v680, 0.1
    %v735 = vmul.f32 %v685, 0.1
    %v736 = vmul.f32 %v688, 0.1
    %v737 = vmul.f32 %v693, 0.1
    %v738 = vmul.f32 %v696, 0.1
    %v739 = vmul.f32 %v701, 0.1
    %v740 = vmul.f32 %v704, 0.1
    %v741 = vmul.f32 %v709, 0.1
    %v742 = vmul.f32 %v712, 0.1
    %v743 = vmul.f32 %v717, 0.1
    %v744 = vmul.f32 %v720, 0.1
    %v745 = vmul.f32 %v725, 0.1
    %v746 = vmul.f32 %v728, 0.1
    %v747 = vmax.f32 %v669, %v731
    %v748 = vmax.f32 %v672, %v732
    %v749 = vmax.f32 %v677, %v733
    %v750 = vmax.f32 %v680, %v734
    %v751 = vmax.f32 %v685, %v735
    %v752 = vmax.f32 %v688, %v736
    %v753 = vmax.f32 %v693, %v737
    %v754 = vmax.f32 %v696, %v738
    %v755 = vmax.f32 %v701, %v739
    %v756 = vmax.f32 %v704, %v740
    %v757 = vmax.f32 %v709, %v741
    %v758 = vmax.f32 %v712, %v742
    %v759 = vmax.f32 %v717, %v743
    %v760 = vmax.f32 %v720, %v744
    %v761 = vmax.f32 %v725, %v745
    %v762 = vmax.f32 %v728, %v746
    %v763 = vpack.c.bf16 %v748, %v747
    %v764 = vpack.c.bf16 %v750, %v749
    %v765 = vpack.c.bf16 %v752, %v751
    %v766 = vpack.c.bf16 %v754, %v753
    %v767 = vpack.c.bf16 %v756, %v755
    %v768 = vpack.c.bf16 %v758, %v757
    %v769 = vpack.c.bf16 %v760, %v759
    %v770 = vpack.c.bf16 %v762, %v761
    %v771 = vld [vmem:[%s7] sm:$0xf]
    %v772 = vld [vmem:[%s7 + $0x4] sm:$0xf]
    %v773 = vld [vmem:[%s7 + $0x8] sm:$0xf]
    %v774 = vld [vmem:[%s7 + $0xc] sm:$0xf]
    %v775 = vld [vmem:[%s7 + $0x10] sm:$0xf]
    %v776 = vld [vmem:[%s7 + $0x14] sm:$0xf]
    %v777 = vld [vmem:[%s7 + $0x18] sm:$0xf]
    %v778 = vld [vmem:[%s7 + $0x1c] sm:$0xf]
    %v779 = vld [vmem:[%s7 + $0x20] sm:$0xf]
    %v780 = vld [vmem:[%s7 + $0x24] sm:$0xf]
    %v781 = vld [vmem:[%s7 + $0x28] sm:$0xf]
    %v782 = vld [vmem:[%s7 + $0x2c] sm:$0xf]
    %v783 = vld [vmem:[%s7 + $0x30] sm:$0xf]
    %v784 = vld [vmem:[%s7 + $0x34] sm:$0xf]
    %v785 = vld [vmem:[%s7 + $0x38] sm:$0xf]
    %v786 = vld [vmem:[%s7 + $0x3c] sm:$0xf]
    %v787 = vld [vmem:[#allocation8] sm:$0x1]
    %v789 = vlaneseq
    %v790 = vshrl.u32 %v789, 7
    %v791 = vsub.s32 0, %v790
    %v792 = vrot.slane %v787, %v791
    %v810 = vunpack.c.l.b16 %v771
    %v811 = vunpack.c.l.b16 %v772
    %v812 = vunpack.c.l.b16 %v773
    %v813 = vunpack.c.l.b16 %v774
    %v814 = vunpack.c.l.b16 %v775
    %v815 = vunpack.c.l.b16 %v776
    %v816 = vunpack.c.l.b16 %v777
    %v817 = vunpack.c.l.b16 %v778
    %v818 = vunpack.c.l.b16 %v779
    %v819 = vunpack.c.l.b16 %v780
    %v820 = vunpack.c.l.b16 %v781
    %v821 = vunpack.c.l.b16 %v782
    %v822 = vunpack.c.l.b16 %v783
    %v823 = vunpack.c.l.b16 %v784
    %v824 = vunpack.c.l.b16 %v785
    %v825 = vunpack.c.l.b16 %v786
    %v826 = vpack.c.b16 %v811, %v810
    %v827 = vpack.c.b16 %v813, %v812
    %v828 = vpack.c.b16 %v815, %v814
    %v829 = vpack.c.b16 %v817, %v816
    %v830 = vpack.c.b16 %v819, %v818
    %v831 = vpack.c.b16 %v821, %v820
    %v832 = vpack.c.b16 %v823, %v822
    %v833 = vpack.c.b16 %v825, %v824
    %842 = vmatprep.subr.bf16.mxu0 0
    %843 = vmatpush1.bf16.msra.mxu0 %v826
    %844 = vmatprep.subr.bf16.mxu0 0
    %845 = vmatpush1.bf16.msra.mxu0 %v827
    %846 = vmatprep.subr.bf16.mxu0 0
    %847 = vmatpush1.bf16.msra.mxu0 %v828
    %848 = vmatprep.subr.bf16.mxu0 0
    %849 = vmatpush1.bf16.msra.mxu0 %v829
    %850 = vmatprep.subr.bf16.mxu0 0
    %851 = vmatpush1.bf16.msra.mxu0 %v830
    %852 = vmatprep.subr.bf16.mxu0 0
    %853 = vmatpush1.bf16.msra.mxu0 %v831
    %854 = vmatprep.subr.bf16.mxu0 0
    %855 = vmatpush1.bf16.msra.mxu0 %v832
    %856 = vmatprep.subr.bf16.mxu0 0
    %857 = vmatpush1.bf16.msra.mxu0 %v833
    %858 = vmatprep.subr.bf16.mxu0 0
    %859 = vmatpush1.bf16.msra.mxu0 0
    %860 = vmatprep.subr.bf16.mxu0 0
    %861 = vmatpush1.bf16.msra.mxu0 0
    %862 = vmatprep.subr.bf16.mxu0 0
    %863 = vmatpush1.bf16.msra.mxu0 0
    %864 = vmatprep.subr.bf16.mxu0 0
    %865 = vmatpush1.bf16.msra.mxu0 0
    %866 = vmatprep.subr.bf16.mxu0 0
    %867 = vmatpush1.bf16.msra.mxu0 0
    %868 = vmatprep.subr.bf16.mxu0 0
    %869 = vmatpush1.bf16.msra.mxu0 0
    %870 = vmatprep.subr.bf16.mxu0 0
    %871 = vmatpush1.bf16.msra.mxu0 0
    %872 = vmatprep.subr.bf16.mxu0 0
    %873 = vmatpush1.bf16.msra.mxu0 0
    %874 = vmatprep.mubr.bf16.mxu0 0
    %875 = vmatmul.mubr.bf16.gmra.mrb[0].mxu0 %v763
    %v876 = vpop.f32.mrb[0].mxu0
    %v877 = vadd.f32 %v792, %v876
    %v878 = vpop.f32.mrb[0].mxu0
    %v879 = vpop.f32.mrb[0].mxu0
    %v880 = vadd.f32 %v792, %v879
    %v881 = vpop.f32.mrb[0].mxu0
    %882 = vmatprep.mubr.bf16.mxu0 0
    %883 = vmatmul.mubr.bf16.gmra.mrb[0].mxu0 %v764
    %v884 = vpop.f32.mrb[0].mxu0
    %v885 = vadd.f32 %v792, %v884
    %v886 = vpop.f32.mrb[0].mxu0
    %v887 = vpop.f32.mrb[0].mxu0
    %v888 = vadd.f32 %v792, %v887
    %v889 = vpop.f32.mrb[0].mxu0
    %890 = vmatprep.mubr.bf16.mxu0 0
    %891 = vmatmul.mubr.bf16.gmra.mrb[0].mxu0 %v765
    %v892 = vpop.f32.mrb[0].mxu0
    %v893 = vadd.f32 %v792, %v892
    %v894 = vpop.f32.mrb[0].mxu0
    %v895 = vpop.f32.mrb[0].mxu0
    %v896 = vadd.f32 %v792, %v895
    %v897 = vpop.f32.mrb[0].mxu0
    %898 = vmatprep.mubr.bf16.mxu0 0
    %899 = vmatmul.mubr.bf16.gmra.mrb[0].mxu0 %v766
    %v900 = vpop.f32.mrb[0].mxu0
    %v901 = vadd.f32 %v792, %v900
    %v902 = vpop.f32.mrb[0].mxu0
    %v903 = vpop.f32.mrb[0].mxu0
    %v904 = vadd.f32 %v792, %v903
    %v905 = vpop.f32.mrb[0].mxu0
    %906 = vmatprep.mubr.bf16.mxu0 0
    %907 = vmatmul.mubr.bf16.gmra.mrb[0].mxu0 %v767
    %v908 = vpop.f32.mrb[0].mxu0
    %v909 = vadd.f32 %v792, %v908
    %v910 = vpop.f32.mrb[0].mxu0
    %v911 = vpop.f32.mrb[0].mxu0
    %v912 = vadd.f32 %v792, %v911
    %v913 = vpop.f32.mrb[0].mxu0
    %914 = vmatprep.mubr.bf16.mxu0 0
    %915 = vmatmul.mubr.bf16.gmra.mrb[0].mxu0 %v768
    %v916 = vpop.f32.mrb[0].mxu0
    %v917 = vadd.f32 %v792, %v916
    %v918 = vpop.f32.mrb[0].mxu0
    %v919 = vpop.f32.mrb[0].mxu0
    %v920 = vadd.f32 %v792, %v919
    %v921 = vpop.f32.mrb[0].mxu0
    %922 = vmatprep.mubr.bf16.mxu0 0
    %923 = vmatmul.mubr.bf16.gmra.mrb[0].mxu0 %v769
    %v924 = vpop.f32.mrb[0].mxu0
    %v925 = vadd.f32 %v792, %v924
    %v926 = vpop.f32.mrb[0].mxu0
    %v927 = vpop.f32.mrb[0].mxu0
    %v928 = vadd.f32 %v792, %v927
    %v929 = vpop.f32.mrb[0].mxu0
    %930 = vmatprep.mubr.bf16.mxu0 0
    %931 = vmatmul.mubr.bf16.gmra.mrb[0].mxu0 %v770
    %v932 = vpop.f32.mrb[0].mxu0
    %v933 = vadd.f32 %v792, %v932
    %v934 = vpop.f32.mrb[0].mxu0
    %v935 = vpop.f32.mrb[0].mxu0
    %v936 = vadd.f32 %v792, %v935
    %v937 = vpop.f32.mrb[0].mxu0
    %938 = vdwg.mxu0
    %v939 = vmul.f32 %v877, 0.1
    %v940 = vmul.f32 %v880, 0.1
    %v941 = vmul.f32 %v885, 0.1
    %v942 = vmul.f32 %v888, 0.1
    %v943 = vmul.f32 %v893, 0.1
    %v944 = vmul.f32 %v896, 0.1
    %v945 = vmul.f32 %v901, 0.1
    %v946 = vmul.f32 %v904, 0.1
    %v947 = vmul.f32 %v909, 0.1
    %v948 = vmul.f32 %v912, 0.1
    %v949 = vmul.f32 %v917, 0.1
    %v950 = vmul.f32 %v920, 0.1
    %v951 = vmul.f32 %v925, 0.1
    %v952 = vmul.f32 %v928, 0.1
    %v953 = vmul.f32 %v933, 0.1
    %v954 = vmul.f32 %v936, 0.1
    %v955 = vmax.f32 %v877, %v939
    %v956 = vmax.f32 %v880, %v940
    %v957 = vmax.f32 %v885, %v941
    %v958 = vmax.f32 %v888, %v942
    %v959 = vmax.f32 %v893, %v943
    %v960 = vmax.f32 %v896, %v944
    %v961 = vmax.f32 %v901, %v945
    %v962 = vmax.f32 %v904, %v946
    %v963 = vmax.f32 %v909, %v947
    %v964 = vmax.f32 %v912, %v948
    %v965 = vmax.f32 %v917, %v949
    %v966 = vmax.f32 %v920, %v950
    %v967 = vmax.f32 %v925, %v951
    %v968 = vmax.f32 %v928, %v952
    %v969 = vmax.f32 %v933, %v953
    %v970 = vmax.f32 %v936, %v954
    %v971 = vpack.c.bf16 %v956, %v955
    %v972 = vpack.c.bf16 %v958, %v957
    %v973 = vpack.c.bf16 %v960, %v959
    %v974 = vpack.c.bf16 %v962, %v961
    %v975 = vpack.c.bf16 %v964, %v963
    %v976 = vpack.c.bf16 %v966, %v965
    %v977 = vpack.c.bf16 %v968, %v967
    %v978 = vpack.c.bf16 %v970, %v969
    %v979 = vld [vmem:[%s9] sm:$0xf]
    %v980 = vld [vmem:[%s9 + $0x4] sm:$0xf]
    %v981 = vld [vmem:[%s9 + $0x8] sm:$0xf]
    %v982 = vld [vmem:[%s9 + $0xc] sm:$0xf]
    %v983 = vld [vmem:[%s9 + $0x10] sm:$0xf]
    %v984 = vld [vmem:[%s9 + $0x14] sm:$0xf]
    %v985 = vld [vmem:[%s9 + $0x18] sm:$0xf]
    %v986 = vld [vmem:[%s9 + $0x1c] sm:$0xf]
    %v987 = vld [vmem:[%s9 + $0x20] sm:$0xf]
    %v988 = vld [vmem:[%s9 + $0x24] sm:$0xf]
    %v989 = vld [vmem:[%s9 + $0x28] sm:$0xf]
    %v990 = vld [vmem:[%s9 + $0x2c] sm:$0xf]
    %v991 = vld [vmem:[%s9 + $0x30] sm:$0xf]
    %v992 = vld [vmem:[%s9 + $0x34] sm:$0xf]
    %v993 = vld [vmem:[%s9 + $0x38] sm:$0xf]
    %v994 = vld [vmem:[%s9 + $0x3c] sm:$0xf]
    %v995 = vld [vmem:[#allocation10] sm:$0x1]
    %v997 = vlaneseq
    %v998 = vshrl.u32 %v997, 7
    %v999 = vsub.s32 0, %v998
    %v1000 = vrot.slane %v995, %v999
    %v1018 = vunpack.c.l.b16 %v979
    %v1019 = vunpack.c.l.b16 %v980
    %v1020 = vunpack.c.l.b16 %v981
    %v1021 = vunpack.c.l.b16 %v982
    %v1022 = vunpack.c.l.b16 %v983
    %v1023 = vunpack.c.l.b16 %v984
    %v1024 = vunpack.c.l.b16 %v985
    %v1025 = vunpack.c.l.b16 %v986
    %v1026 = vunpack.c.l.b16 %v987
    %v1027 = vunpack.c.l.b16 %v988
    %v1028 = vunpack.c.l.b16 %v989
    %v1029 = vunpack.c.l.b16 %v990
    %v1030 = vunpack.c.l.b16 %v991
    %v1031 = vunpack.c.l.b16 %v992
    %v1032 = vunpack.c.l.b16 %v993
    %v1033 = vunpack.c.l.b16 %v994
    %v1034 = vpack.c.b16 %v1019, %v1018
    %v1035 = vpack.c.b16 %v1021, %v1020
    %v1036 = vpack.c.b16 %v1023, %v1022
    %v1037 = vpack.c.b16 %v1025, %v1024
    %v1038 = vpack.c.b16 %v1027, %v1026
    %v1039 = vpack.c.b16 %v1029, %v1028
    %v1040 = vpack.c.b16 %v1031, %v1030
    %v1041 = vpack.c.b16 %v1033, %v1032
    %1050 = vmatprep.subr.bf16.mxu0 0
    %1051 = vmatpush1.bf16.msra.mxu0 %v1034
    %1052 = vmatprep.subr.bf16.mxu0 0
    %1053 = vmatpush1.bf16.msra.mxu0 %v1035
    %1054 = vmatprep.subr.bf16.mxu0 0
    %1055 = vmatpush1.bf16.msra.mxu0 %v1036
    %1056 = vmatprep.subr.bf16.mxu0 0
    %1057 = vmatpush1.bf16.msra.mxu0 %v1037
    %1058 = vmatprep.subr.bf16.mxu0 0
    %1059 = vmatpush1.bf16.msra.mxu0 %v1038
    %1060 = vmatprep.subr.bf16.mxu0 0
    %1061 = vmatpush1.bf16.msra.mxu0 %v1039
    %1062 = vmatprep.subr.bf16.mxu0 0
    %1063 = vmatpush1.bf16.msra.mxu0 %v1040
    %1064 = vmatprep.subr.bf16.mxu0 0
    %1065 = vmatpush1.bf16.msra.mxu0 %v1041
    %1066 = vmatprep.subr.bf16.mxu0 0
    %1067 = vmatpush1.bf16.msra.mxu0 0
    %1068 = vmatprep.subr.bf16.mxu0 0
    %1069 = vmatpush1.bf16.msra.mxu0 0
    %1070 = vmatprep.subr.bf16.mxu0 0
    %1071 = vmatpush1.bf16.msra.mxu0 0
    %1072 = vmatprep.subr.bf16.mxu0 0
    %1073 = vmatpush1.bf16.msra.mxu0 0
    %1074 = vmatprep.subr.bf16.mxu0 0
    %1075 = vmatpush1.bf16.msra.mxu0 0
    %1076 = vmatprep.subr.bf16.mxu0 0
    %1077 = vmatpush1.bf16.msra.mxu0 0
    %1078 = vmatprep.subr.bf16.mxu0 0
    %1079 = vmatpush1.bf16.msra.mxu0 0
    %1080 = vmatprep.subr.bf16.mxu0 0
    %1081 = vmatpush1.bf16.msra.mxu0 0
    %1082 = vmatprep.mubr.bf16.mxu0 0
    %1083 = vmatmul.mubr.bf16.gmra.mrb[0].mxu0 %v971
    %v1084 = vpop.f32.mrb[0].mxu0
    %v1085 = vadd.f32 %v1000, %v1084
    %v1086 = vpop.f32.mrb[0].mxu0
    %v1087 = vpop.f32.mrb[0].mxu0
    %v1088 = vadd.f32 %v1000, %v1087
    %v1089 = vpop.f32.mrb[0].mxu0
    %1090 = vmatprep.mubr.bf16.mxu0 0
    %1091 = vmatmul.mubr.bf16.gmra.mrb[0].mxu0 %v972
    %v1092 = vpop.f32.mrb[0].mxu0
    %v1093 = vadd.f32 %v1000, %v1092
    %v1094 = vpop.f32.mrb[0].mxu0
    %v1095 = vpop.f32.mrb[0].mxu0
    %v1096 = vadd.f32 %v1000, %v1095
    %v1097 = vpop.f32.mrb[0].mxu0
    %1098 = vmatprep.mubr.bf16.mxu0 0
    %1099 = vmatmul.mubr.bf16.gmra.mrb[0].mxu0 %v973
    %v1100 = vpop.f32.mrb[0].mxu0
    %v1101 = vadd.f32 %v1000, %v1100
    %v1102 = vpop.f32.mrb[0].mxu0
    %v1103 = vpop.f32.mrb[0].mxu0
    %v1104 = vadd.f32 %v1000, %v1103
    %v1105 = vpop.f32.mrb[0].mxu0
    %1106 = vmatprep.mubr.bf16.mxu0 0
    %1107 = vmatmul.mubr.bf16.gmra.mrb[0].mxu0 %v974
    %v1108 = vpop.f32.mrb[0].mxu0
    %v1109 = vadd.f32 %v1000, %v1108
    %v1110 = vpop.f32.mrb[0].mxu0
    %v1111 = vpop.f32.mrb[0].mxu0
    %v1112 = vadd.f32 %v1000, %v1111
    %v1113 = vpop.f32.mrb[0].mxu0
    %1114 = vmatprep.mubr.bf16.mxu0 0
    %1115 = vmatmul.mubr.bf16.gmra.mrb[0].mxu0 %v975
    %v1116 = vpop.f32.mrb[0].mxu0
    %v1117 = vadd.f32 %v1000, %v1116
    %v1118 = vpop.f32.mrb[0].mxu0
    %v1119 = vpop.f32.mrb[0].mxu0
    %v1120 = vadd.f32 %v1000, %v1119
    %v1121 = vpop.f32.mrb[0].mxu0
    %1122 = vmatprep.mubr.bf16.mxu0 0
    %1123 = vmatmul.mubr.bf16.gmra.mrb[0].mxu0 %v976
    %v1124 = vpop.f32.mrb[0].mxu0
    %v1125 = vadd.f32 %v1000, %v1124
    %v1126 = vpop.f32.mrb[0].mxu0
    %v1127 = vpop.f32.mrb[0].mxu0
    %v1128 = vadd.f32 %v1000, %v1127
    %v1129 = vpop.f32.mrb[0].mxu0
    %1130 = vmatprep.mubr.bf16.mxu0 0
    %1131 = vmatmul.mubr.bf16.gmra.mrb[0].mxu0 %v977
    %v1132 = vpop.f32.mrb[0].mxu0
    %v1133 = vadd.f32 %v1000, %v1132
    %v1134 = vpop.f32.mrb[0].mxu0
    %v1135 = vpop.f32.mrb[0].mxu0
    %v1136 = vadd.f32 %v1000, %v1135
    %v1137 = vpop.f32.mrb[0].mxu0
    %1138 = vmatprep.mubr.bf16.mxu0 0
    %1139 = vmatmul.mubr.bf16.gmra.mrb[0].mxu0 %v978
    %v1140 = vpop.f32.mrb[0].mxu0
    %v1141 = vadd.f32 %v1000, %v1140
    %v1142 = vpop.f32.mrb[0].mxu0
    %v1143 = vpop.f32.mrb[0].mxu0
    %v1144 = vadd.f32 %v1000, %v1143
    %v1145 = vpop.f32.mrb[0].mxu0
    %1146 = vdwg.mxu0
    %vm1147 = vcmask 261120
    %v1148 = vsel %vm1147, %v1085, 0.0
    %v1149 = vsel %vm1147, %v1088, 0.0
    %v1150 = vadd.f32 %v1148, %v1149
    %v1151 = vsel %vm1147, %v1093, 0.0
    %v1152 = vadd.f32 %v1150, %v1151
    %v1153 = vsel %vm1147, %v1096, 0.0
    %v1154 = vadd.f32 %v1152, %v1153
    %v1155 = vsel %vm1147, %v1101, 0.0
    %v1156 = vadd.f32 %v1154, %v1155
    %v1157 = vsel %vm1147, %v1104, 0.0
    %v1158 = vadd.f32 %v1156, %v1157
    %v1159 = vsel %vm1147, %v1109, 0.0
    %v1160 = vadd.f32 %v1158, %v1159
    %v1161 = vsel %vm1147, %v1112, 0.0
    %v1162 = vadd.f32 %v1160, %v1161
    %v1163 = vrot.slane %v1162, 4
    %v1164 = vadd.f32 %v1162, %v1163
    %v1165 = vrot.slane %v1164, 2
    %v1166 = vadd.f32 %v1164, %v1165
    %v1167 = vrot.slane %v1166, 1
    %v1168 = vadd.f32 %v1166, %v1167
    %v1169 = vsel %vm1147, %v1117, 0.0
    %v1170 = vsel %vm1147, %v1120, 0.0
    %v1171 = vadd.f32 %v1169, %v1170
    %v1172 = vsel %vm1147, %v1125, 0.0
    %v1173 = vadd.f32 %v1171, %v1172
    %v1174 = vsel %vm1147, %v1128, 0.0
    %v1175 = vadd.f32 %v1173, %v1174
    %v1176 = vsel %vm1147, %v1133, 0.0
    %v1177 = vadd.f32 %v1175, %v1176
    %v1178 = vsel %vm1147, %v1136, 0.0
    %v1179 = vadd.f32 %v1177, %v1178
    %v1180 = vsel %vm1147, %v1141, 0.0
    %v1181 = vadd.f32 %v1179, %v1180
    %v1182 = vsel %vm1147, %v1144, 0.0
    %v1183 = vadd.f32 %v1181, %v1182
    %v1184 = vrot.slane %v1183, 4
    %v1185 = vadd.f32 %v1183, %v1184
    %v1186 = vrot.slane %v1185, 2
    %v1187 = vadd.f32 %v1185, %v1186
    %v1188 = vrot.slane %v1187, 1
    %v1189 = vadd.f32 %v1187, %v1188
    %v1190 = vmul.f32 %v1168, 0.015625
    %v1191 = vmul.f32 %v1189, 0.015625
    %v1192 = vpack.c.bf16 %v1190, %v1190
    %v1193 = vpack.c.bf16 %v1191, %v1191
    %v1194 = vld [vmem:[%s11] sm:$0xf]
    %v1195 = vld [vmem:[%s11 + $0x4] sm:$0xf]
    %v1196 = vld [vmem:[%s11 + $0x8] sm:$0xf]
    %v1197 = vld [vmem:[%s11 + $0xc] sm:$0xf]
    %v1198 = vld [vmem:[%s12] sm:$0x1]
    %v1200 = vlaneseq
    %v1201 = vshrl.u32 %v1200, 7
    %v1202 = vsub.s32 0, %v1201
    %v1203 = vrot.slane %v1198, %v1202
    %v1207 = vunpack.c.l.b16 %v1192
    %v1208 = vunpack.c.l.b16 %v1193
    %vm1209 = vcmask 1041409
    %v1210 = vsel %vm1209, %v1208, %v1207
    %v1211 = vpack.c.b16 %v1210, %v1210
    %v1216 = vunpack.c.l.b16 %v1194
    %v1217 = vunpack.c.l.b16 %v1195
    %v1218 = vunpack.c.l.b16 %v1196
    %v1219 = vunpack.c.l.b16 %v1197
    %v1220 = vpack.c.b16 %v1217, %v1216
    %v1221 = vpack.c.b16 %v1219, %v1218
    %v1225 = vsel %vm1147, %v1211, 0
    %1227 = vmatprep.subr.bf16.mxu0 0
    %1228 = vmatpush1.bf16.msra.mxu0 %v1220
    %1229 = vmatprep.subr.bf16.mxu0 0
    %1230 = vmatpush1.bf16.msra.mxu0 %v1221
    %1231 = vmatprep.subr.bf16.mxu0 0
    %1232 = vmatpush1.bf16.msra.mxu0 0
    %1233 = vmatprep.subr.bf16.mxu0 0
    %1234 = vmatpush1.bf16.msra.mxu0 0
    %1235 = vmatprep.subr.bf16.mxu0 0
    %1236 = vmatpush1.bf16.msra.mxu0 0
    %1237 = vmatprep.subr.bf16.mxu0 0
    %1238 = vmatpush1.bf16.msra.mxu0 0
    %1239 = vmatprep.subr.bf16.mxu0 0
    %1240 = vmatpush1.bf16.msra.mxu0 0
    %1241 = vmatprep.subr.bf16.mxu0 0
    %1242 = vmatpush1.bf16.msra.mxu0 0
    %1243 = vmatprep.subr.bf16.mxu0 0
    %1244 = vmatpush1.bf16.msra.mxu0 0
    %1245 = vmatprep.subr.bf16.mxu0 0
    %1246 = vmatpush1.bf16.msra.mxu0 0
    %1247 = vmatprep.subr.bf16.mxu0 0
    %1248 = vmatpush1.bf16.msra.mxu0 0
    %1249 = vmatprep.subr.bf16.mxu0 0
    %1250 = vmatpush1.bf16.msra.mxu0 0
    %1251 = vmatprep.subr.bf16.mxu0 0
    %1252 = vmatpush1.bf16.msra.mxu0 0
    %1253 = vmatprep.subr.bf16.mxu0 0
    %1254 = vmatpush1.bf16.msra.mxu0 0
    %1255 = vmatprep.subr.bf16.mxu0 0
    %1256 = vmatpush1.bf16.msra.mxu0 0
    %1257 = vmatprep.subr.bf16.mxu0 0
    %1258 = vmatpush1.bf16.msra.mxu0 0
    %1259 = vmatprep.mubr.bf16.mxu0 0
    %1260 = vmatmul.mubr.bf16.gmra.mrb[0].mxu0 %v1225
    %v1261 = vpop.f32.mrb[0].mxu0
    %v1262 = vadd.f32 %v1203, %v1261
    %v1263 = vpop.f32.mrb[0].mxu0
    %v1264 = vpop.f32.mrb[0].mxu0
    %v1265 = vpop.f32.mrb[0].mxu0
    %1266 = vdwg.mxu0
    %1267 = vst [vmem:[#allocation11] sm:$0x3] %v1262
    // Predicated region
    $region74: #{tpu_custom_call.1} parent=1 // pred_check
      _
    $region75: #{tpu_custom_call.1} parent=1 // pred_check_branch
      %1269 = sbr.rel (0) target = $region77
    $region76: #{tpu_custom_call.1} parent=1 // pred_region
      %s1271 = ssub.s32 32, 32
      %1272 = vsyncadd [#allocation4], %s1271
      %s1274 = sshll.u32 [#allocation11], 4
      %s1275 = int_to_ptr.vmem [resolvable:$true] %s1274
      %1277 = dma.vmem_to_hbm [thread:$0]  %s1275, 32, %s13, [#allocation4]
    $region77: #{tpu_custom_call.1} parent=1 // pred_fallthru
      _
    // Predicated region
    $region78: #{tpu_custom_call.1} parent=1 // pred_check
      _
    $region79: #{tpu_custom_call.1} parent=1 // pred_check_branch
      %1279 = sbr.rel (0) target = $region81
    $region80: #{tpu_custom_call.1} parent=1 // pred_region
      %1280 = dma.done [#allocation4], 32
    $region81: #{tpu_custom_call.1} parent=1 // pred_fallthru
      _
    %1281 = vsyncpa [#allocation3], 1
    %1282 = vsyncpa [#allocation6], 1
    %1283 = vsyncpa [#allocation9], 1
    %1284 = vsyncpa [#allocation4], 1

</llo_original>
